<compile_context>
chip_gen: v7x
topology: tpu7x:2x2x1
jax: 0.10.0
libtpu: 0.0.40
codegen_flags: <defaults>
</compile_context>

<pallas_src>
import functools

import jax
import jax.numpy as jnp
import numpy as np
from jax.experimental import pallas as pl
from jax.experimental.pallas import tpu as pltpu


def _temporal_conv_kernel(*refs, kt, c_in, c_out, T, V, pad_top, act, nb,
                          has_wres):
    # refs (in order):
    #   x_ref   : (nb, c_in, T*V)      raw, unpadded activation block (flattened NCHW)
    #   w_ref   : (kt, co_conv, c_in)  per-tap conv weight (1x1 conv pre-folded if any)
    #   b_ref   : (co_conv, 1)         conv bias
    #   wres_ref: (c_out, c_in)        1x1 residual weight   [only if has_wres]
    #   o_ref   : (nb, c_out, T*V)     output block
    #   xpad    : (nb, c_in, Tp*V)     VMEM scratch holding the temporally padded block
    if has_wres:
        x_ref, w_ref, b_ref, wres_ref, o_ref, xpad = refs
    else:
        x_ref, w_ref, b_ref, o_ref, xpad = refs
        wres_ref = None

    TV = T * V

    # Build the temporal zero halo in VMEM (replaces the wrapper jnp.pad HBM pass).
    xpad[...] = jnp.zeros_like(xpad)
    xpad[:, :, pad_top * V: pad_top * V + TV] = x_ref[...].astype(jnp.float32)

    for b in range(nb):                 # static unroll over batch elements in block
        # kt accumulated lane-dense MXU dots (no im2col concat copy).
        # Tap dk of the cross-correlation reads padded columns [dk*V, dk*V + T*V)
        # and multiplies weight tap w_ref[dk] -- this ordering must stay in sync
        # with the wrapper's (kt, co, c_in) weight layout (tap index leading).
        acc = None
        for dk in range(kt):
            tap = xpad[b, :, dk * V: dk * V + TV]                   # (c_in, T*V)
            p = jnp.dot(w_ref[dk], tap, preferred_element_type=jnp.float32)
            acc = p if acc is None else acc + p                      # (co, T*V)
        acc = acc + b_ref[...]                                       # bias, (co,1) bcast

        if act in ('GLU', 'relu'):
            x_b = x_ref[b].astype(jnp.float32)                       # (c_in, T*V)
            if has_wres:
                # c_in > c_out: residual = 1x1-conv(x), computed on the resident block.
                x_in = jnp.dot(wres_ref[...], x_b,
                               preferred_element_type=jnp.float32)   # (c_out, T*V)
            elif c_in == c_out:
                x_in = x_b
            else:
                # c_in < c_out: the zero-filled channels contribute zero residual rows.
                x_in = jnp.concatenate(
                    [x_b, jnp.zeros((c_out - c_in, TV), jnp.float32)], axis=0)

        if act == 'GLU':
            out = (acc[:c_out, :] + x_in) * jax.nn.sigmoid(acc[c_out:, :])
        elif act == 'relu':
            out = jnp.maximum(acc + x_in, 0.0)
        elif act == 'sigmoid':
            out = jax.nn.sigmoid(acc)
        elif act == 'linear':
            out = acc
        else:
            raise ValueError(f'activation "{act}" is not defined.')

        o_ref[b] = out.astype(o_ref.dtype)


def temporal_conv_layer_forward(x_nchw, params, *, kt, c_in, c_out, act='relu',
                                nb=None):
    """Forward pass of temporal_conv_layer.  x_nchw: (N, c_in, T, V) -> (N, c_out, T, V)."""
    N, _, T, V = x_nchw.shape
    TV = T * V
    pad_top = (kt - 1) // 2
    Tp = T + kt - 1

    # ---- tiny offline weight prep (the activation is never re-written in HBM) ----
    w_conv = params['w_conv'][..., 0]                          # (co_conv, c_out, kt)
    co_conv = w_conv.shape[0]
    if c_in > c_out:
        # Fold the 1x1 channel-reduction conv into the temporal conv weight.
        w_taps = jnp.einsum('ock,ci->koi', w_conv, params['w_1x1'])  # (kt, co, c_in)
    else:
        # Conv-input channels [c_in, c_out) are identically zero -> drop their columns.
        w_taps = jnp.transpose(w_conv[:, :c_in, :], (2, 0, 1))       # (kt, co, c_in)
    b_eff = params['b_conv'].reshape(co_conv, 1)
    has_wres = (c_in > c_out) and act in ('GLU', 'relu')

    x_flat = x_nchw.reshape(N, c_in, TV)        # free reshape; unpadded, no extra HBM pass

    # Batch elements per grid step: aim for ~2 MiB of activation per step but keep
    # grid length >= 2 so the 'parallel' axis shards across dual-TC chips (v7x).
    if nb is None:
        per_elem = c_in * TV * x_nchw.dtype.itemsize
        nb = max(1, min(max(1, N // 2), (2 << 20) // max(per_elem, 1)))
        while N % nb:
            nb -= 1

    in_specs = [
        pl.BlockSpec((nb, c_in, TV), lambda n: (n, 0, 0)),
        pl.BlockSpec((kt, co_conv, c_in), lambda n: (0, 0, 0)),
        pl.BlockSpec((co_conv, 1), lambda n: (0, 0)),
    ]
    args = [x_flat, w_taps, b_eff]
    if has_wres:
        in_specs.append(pl.BlockSpec((c_out, c_in), lambda n: (0, 0)))
        args.append(params['w_1x1'])

    kernel = functools.partial(
        _temporal_conv_kernel, kt=kt, c_in=c_in, c_out=c_out, T=T, V=V,
        pad_top=pad_top, act=act, nb=nb, has_wres=has_wres)

    out_flat = pl.pallas_call(
        kernel,
        out_shape=jax.ShapeDtypeStruct((N, c_out, TV), x_nchw.dtype),
        grid_spec=pltpu.PrefetchScalarGridSpec(
            num_scalar_prefetch=0,
            grid=(N // nb,),
            in_specs=in_specs,
            out_specs=pl.BlockSpec((nb, c_out, TV), lambda n: (n, 0, 0)),
            scratch_shapes=[pltpu.VMEM((nb, c_in, Tp * V), jnp.float32)],
        ),
        compiler_params=pltpu.CompilerParams(dimension_semantics=("parallel",)),
    )(*args)

    return out_flat.reshape(N, c_out, T, V)     # free reshape back to NCHW


def reference_forward(x_nchw, params, *, kt, c_in, c_out, act='relu'):
    """Pure-JAX reference (mirrors the PyTorch module) for verification."""
    if c_in > c_out:
        x_in = jnp.einsum('oc,nctv->notv', params['w_1x1'], x_nchw)
    elif c_in < c_out:
        fill = jnp.zeros((x_nchw.shape[0], c_out - c_in) + x_nchw.shape[2:], x_nchw.dtype)
        x_in = jnp.concatenate([x_nchw, fill], axis=1)
    else:
        x_in = x_nchw
    pad_top = (kt - 1) // 2
    pad_bot = (kt - 1) - pad_top
    conv = jax.lax.conv_general_dilated(
        x_in, params['w_conv'], window_strides=(1, 1),
        padding=((pad_top, pad_bot), (0, 0)),
        dimension_numbers=('NCHW', 'OIHW', 'NCHW'))
    conv = conv + params['b_conv'][None, :, None, None]
    if act == 'GLU':
        return (conv[:, :c_out] + x_in) * jax.nn.sigmoid(conv[:, -c_out:])
    if act == 'linear':
        return conv
    if act == 'sigmoid':
        return jax.nn.sigmoid(conv)
    if act == 'relu':
        return jax.nn.relu(conv + x_in)
    raise ValueError(act)


if __name__ == "__main__":
    N, T, V = 2, 8, 16          # T*V = 128 -> exactly lane-dense output tiles
    configs = [
        dict(kt=3, c_in=4, c_out=8, act='relu'),      # c_in < c_out (real-channel-only K)
        dict(kt=3, c_in=8, c_out=8, act='GLU'),       # c_in == c_out, gated path
        dict(kt=2, c_in=16, c_out=8, act='sigmoid'),  # c_in > c_out, composed weights
        dict(kt=3, c_in=16, c_out=8, act='relu'),     # c_in > c_out + in-kernel residual
    ]

    key = jax.random.PRNGKey(0)
    for i, cfg in enumerate(configs):
        k = jax.random.fold_in(key, i)
        k1, k2, k3, k4 = jax.random.split(k, 4)
        co_conv = 2 * cfg['c_out'] if cfg['act'] == 'GLU' else cfg['c_out']
        params = {
            # nn.Conv2d(c_out, co_conv, [kt, 1], bias=True) weight / bias
            'w_conv': jax.random.normal(k1, (co_conv, cfg['c_out'], cfg['kt'], 1),
                                        jnp.float32) * 0.1,
            'b_conv': jax.random.normal(k2, (co_conv,), jnp.float32) * 0.1,
            # nn.Conv2d(c_in, c_out, [1, 1], bias=False) weight (used iff c_in > c_out)
            'w_1x1': jax.random.normal(k3, (cfg['c_out'], cfg['c_in']), jnp.float32) * 0.1,
        }
        x = jax.random.normal(k4, (N, cfg['c_in'], T, V), jnp.float32)

        out = jax.block_until_ready(temporal_conv_layer_forward(x, params, **cfg))
        ref = reference_forward(x, params, **cfg)
        np.testing.assert_allclose(np.asarray(out), np.asarray(ref),
                                   rtol=1e-5, atol=1e-5)

    print("KERNEL_OK")
</pallas_src>

<mosaic_0001>
module attributes {stable_mosaic.version = 11 : i64} {
  func.func @_temporal_conv_kernel(%arg0: i32, %arg1: memref<1x4x128xf32, #tpu.memory_space<vmem>>, %arg2: memref<3x8x4xf32, #tpu.memory_space<vmem>>, %arg3: memref<8x1xf32, #tpu.memory_space<vmem>>, %arg4: memref<1x8x128xf32, #tpu.memory_space<vmem>>, %arg5: memref<1x4x160xf32, #tpu.memory_space<vmem>>) attributes {dimension_semantics = [#tpu.dimension_semantics<parallel>], iteration_bounds = array<i64: 2>, scalar_prefetch = 0 : i64, scratch_operands = 1 : i64, tpu.core_type = #tpu.core_type<tc>, window_params = [{transform_indices = @transform_0, window_bounds = array<i64: 1, 4, 128>}, {pipeline_mode = #tpu.pipeline_mode<synchronous>, transform_indices = @transform_1, window_bounds = array<i64: 3, 8, 4>}, {pipeline_mode = #tpu.pipeline_mode<synchronous>, transform_indices = @transform_2, window_bounds = array<i64: 8, 1>}, {transform_indices = @transform_3, window_bounds = array<i64: 1, 8, 128>}]} {
    %cst = arith.constant 0.000000e+00 : f32
    %0 = vector.broadcast %cst : f32 to vector<1x4x160xf32>
    %c0 = arith.constant 0 : index
    %c0_0 = arith.constant 0 : index
    %c0_1 = arith.constant 0 : index
    %1 = vector.load %arg5[%c0, %c0_0, %c0_1] : memref<1x4x160xf32, #tpu.memory_space<vmem>>, vector<1x4x160xf32>
    tpu.vector_store %arg5[%c0, %c0_0, %c0_1], %0 {strides = array<i32>} : memref<1x4x160xf32, #tpu.memory_space<vmem>>, vector<1x4x160xf32>,
    %c0_2 = arith.constant 0 : index
    %c0_3 = arith.constant 0 : index
    %c0_4 = arith.constant 0 : index
    %2 = vector.load %arg1[%c0_2, %c0_3, %c0_4] : memref<1x4x128xf32, #tpu.memory_space<vmem>>, vector<1x4x128xf32>
    %c0_5 = arith.constant 0 : index
    %c0_6 = arith.constant 0 : index
    %c16 = arith.constant 16 : index
    %3 = vector.load %arg5[%c0_5, %c0_6, %c16] : memref<1x4x160xf32, #tpu.memory_space<vmem>>, vector<1x4x128xf32>
    tpu.vector_store %arg5[%c0_5, %c0_6, %c16], %2 {strides = array<i32>} : memref<1x4x160xf32, #tpu.memory_space<vmem>>, vector<1x4x128xf32>,
    %c0_7 = arith.constant 0 : index
    %c0_8 = arith.constant 0 : index
    %c0_9 = arith.constant 0 : index
    %4 = vector.load %arg5[%c0_7, %c0_8, %c0_9] : memref<1x4x160xf32, #tpu.memory_space<vmem>>, vector<1x4x128xf32>
    %5 = vector.shape_cast %4 : vector<1x4x128xf32> to vector<4x128xf32>
    %c0_10 = arith.constant 0 : index
    %c0_11 = arith.constant 0 : index
    %c0_12 = arith.constant 0 : index
    %6 = vector.load %arg2[%c0_10, %c0_11, %c0_12] : memref<3x8x4xf32, #tpu.memory_space<vmem>>, vector<1x8x4xf32>
    %7 = vector.shape_cast %6 : vector<1x8x4xf32> to vector<8x4xf32>
    %cst_13 = arith.constant dense<0.000000e+00> : vector<8x128xf32>
    %8 = tpu.matmul %7, %5, %cst_13 {dimension_numbers = #tpu.dot_dimension_numbers<[1], [0], [0], [1], [0, 0, 1, 1], [], []>} : vector<8x4xf32>, vector<4x128xf32>, vector<8x128xf32> -> vector<8x128xf32>
    %c0_14 = arith.constant 0 : index
    %c0_15 = arith.constant 0 : index
    %c16_16 = arith.constant 16 : index
    %9 = vector.load %arg5[%c0_14, %c0_15, %c16_16] : memref<1x4x160xf32, #tpu.memory_space<vmem>>, vector<1x4x128xf32>
    %10 = vector.shape_cast %9 : vector<1x4x128xf32> to vector<4x128xf32>
    %c1 = arith.constant 1 : index
    %c0_17 = arith.constant 0 : index
    %c0_18 = arith.constant 0 : index
    %11 = vector.load %arg2[%c1, %c0_17, %c0_18] : memref<3x8x4xf32, #tpu.memory_space<vmem>>, vector<1x8x4xf32>
    %12 = vector.shape_cast %11 : vector<1x8x4xf32> to vector<8x4xf32>
    %cst_19 = arith.constant dense<0.000000e+00> : vector<8x128xf32>
    %13 = tpu.matmul %12, %10, %cst_19 {dimension_numbers = #tpu.dot_dimension_numbers<[1], [0], [0], [1], [0, 0, 1, 1], [], []>} : vector<8x4xf32>, vector<4x128xf32>, vector<8x128xf32> -> vector<8x128xf32>
    %14 = arith.addf %8, %13 : vector<8x128xf32>
    %c0_20 = arith.constant 0 : index
    %c0_21 = arith.constant 0 : index
    %c32 = arith.constant 32 : index
    %15 = vector.load %arg5[%c0_20, %c0_21, %c32] : memref<1x4x160xf32, #tpu.memory_space<vmem>>, vector<1x4x128xf32>
    %16 = vector.shape_cast %15 : vector<1x4x128xf32> to vector<4x128xf32>
    %c2 = arith.constant 2 : index
    %c0_22 = arith.constant 0 : index
    %c0_23 = arith.constant 0 : index
    %17 = vector.load %arg2[%c2, %c0_22, %c0_23] : memref<3x8x4xf32, #tpu.memory_space<vmem>>, vector<1x8x4xf32>
    %18 = vector.shape_cast %17 : vector<1x8x4xf32> to vector<8x4xf32>
    %cst_24 = arith.constant dense<0.000000e+00> : vector<8x128xf32>
    %19 = tpu.matmul %18, %16, %cst_24 {dimension_numbers = #tpu.dot_dimension_numbers<[1], [0], [0], [1], [0, 0, 1, 1], [], []>} : vector<8x4xf32>, vector<4x128xf32>, vector<8x128xf32> -> vector<8x128xf32>
    %20 = arith.addf %14, %19 : vector<8x128xf32>
    %c0_25 = arith.constant 0 : index
    %c0_26 = arith.constant 0 : index
    %21 = vector.load %arg3[%c0_25, %c0_26] : memref<8x1xf32, #tpu.memory_space<vmem>>, vector<8x1xf32>
    %22 = vector.broadcast %21 : vector<8x1xf32> to vector<8x128xf32>
    %23 = arith.addf %20, %22 : vector<8x128xf32>
    %c0_27 = arith.constant 0 : index
    %c0_28 = arith.constant 0 : index
    %c0_29 = arith.constant 0 : index
    %24 = vector.load %arg1[%c0_27, %c0_28, %c0_29] : memref<1x4x128xf32, #tpu.memory_space<vmem>>, vector<1x4x128xf32>
    %25 = vector.shape_cast %24 : vector<1x4x128xf32> to vector<4x128xf32>
    %cst_30 = arith.constant 0.000000e+00 : f32
    %26 = vector.broadcast %cst_30 : f32 to vector<4x128xf32>
    %27 = tpu.concatenate %25, %26 in 0 : vector<4x128xf32>, vector<4x128xf32> -> vector<8x128xf32>
    %28 = arith.addf %23, %27 : vector<8x128xf32>
    %cst_31 = arith.constant 0.000000e+00 : f32
    %29 = vector.broadcast %cst_31 : f32 to vector<8x128xf32>
    %30 = arith.maximumf %28, %29 : vector<8x128xf32>
    %c0_32 = arith.constant 0 : index
    %c0_33 = arith.constant 0 : index
    %c0_34 = arith.constant 0 : index
    %31 = vector.load %arg4[%c0_32, %c0_33, %c0_34] : memref<1x8x128xf32, #tpu.memory_space<vmem>>, vector<1x8x128xf32>
    %32 = vector.shape_cast %31 : vector<1x8x128xf32> to vector<8x128xf32>
    %33 = vector.shape_cast %30 : vector<8x128xf32> to vector<1x8x128xf32>
    tpu.vector_store %arg4[%c0_32, %c0_33, %c0_34], %33 {strides = array<i32>} : memref<1x8x128xf32, #tpu.memory_space<vmem>>, vector<1x8x128xf32>,
    return
  }
  func.func @transform_0(%arg0: i32) -> (i32, i32, i32) {
    %c0_i32 = arith.constant 0 : i32
    %c0_i32_0 = arith.constant 0 : i32
    %c0_i32_1 = arith.constant 0 : i32
    return %arg0, %c0_i32, %c0_i32_0 : i32, i32, i32
  }
  func.func @transform_1(%arg0: i32) -> (i32, i32, i32) {
    %c0_i32 = arith.constant 0 : i32
    %c0_i32_0 = arith.constant 0 : i32
    %c0_i32_1 = arith.constant 0 : i32
    %c0_i32_2 = arith.constant 0 : i32
    return %c0_i32, %c0_i32_0, %c0_i32_1 : i32, i32, i32
  }
  func.func @transform_2(%arg0: i32) -> (i32, i32) {
    %c0_i32 = arith.constant 0 : i32
    %c0_i32_0 = arith.constant 0 : i32
    %c0_i32_1 = arith.constant 0 : i32
    return %c0_i32, %c0_i32_0 : i32, i32
  }
  func.func @transform_3(%arg0: i32) -> (i32, i32, i32) {
    %c0_i32 = arith.constant 0 : i32
    %c0_i32_0 = arith.constant 0 : i32
    %c0_i32_1 = arith.constant 0 : i32
    return %arg0, %c0_i32, %c0_i32_0 : i32, i32, i32
  }
}

</mosaic_0001>

<llo_original>
// kernel: tpu_custom_call.1
$region0: #{tpu_custom_call.1}
  #allocation0 [shape = 'u32[]', space=smem, size = 0x4, offset = 0x4, fixed_abs, tag = 'smem constant byte address 0x4 - core index']
  #allocation1 [shape = 'u32[144,128]{1,0:T(1,128)}', space=vmem, size = 0x12000, scoped, tag = 'internal scratch']
  #allocation2 [shape = 'f32[1,4,160]{2,1,0:T(4,128)}', space=vmem, size = 0x1000, scoped, tag = 'scratch operand']
  %s0 = inlined_call_operand.vmem [shape: f32[2,4,128], index: 0, kind: input, shape index: {}]
  %s1 = inlined_call_operand.vmem [shape: f32[3,8,4], index: 1, kind: input, shape index: {}]
  %s2 = inlined_call_operand.vmem [shape: f32[8,1], index: 2, kind: input, shape index: {}]
  %s3 = inlined_call_operand.hbm [shape: f32[2,8,128], index: 3, kind: output, shape index: {}]
  %s4 = sld [smem:[#allocation0]]
  $region45: #{tpu_custom_call.1} parent=0
    _
  %s6 = ssub.s32 1, %s4
  %s7 = scalar_select 0, %s6, %s4
  $region1: #{tpu_custom_call.1} parent=0
    #allocation3 [shape = 'u8[8192]{0}', space=vmem, size = 0x2000, scoped, tag = 'output window, operand 0']
    #allocation4 [shape = 's32[2]{0}', space=sflag, size = 0x8, scoped, tag = 'scoped memory for tpu_custom_call.1']
    %8 = vsyncpa [#allocation4], 0
    %s9 = scalar_lea.sflag [#allocation4], 1
    %10 = vsyncpa %s9, 0
    loop: start=0, step=1, limit=4
    $region2: #{tpu_custom_call.1} parent=1 // loop_pre_header
      _
    $region3: #{tpu_custom_call.1} parent=1 // loop_header
      %s12 = sphi 0, %s16
      %p13 = scmp.ge.s32.totalorder %s12, 4
      %s22 = sphi 0, %s24
      %s25 = sphi 0, %s22
      %s26 = sphi 0, %s25
      %s42 = sphi 0, %s26
      %s46 = sphi 0, %s46
      %s48 = sphi 0, %s46
      %s49 = sphi 0, %s48
      %s63 = sphi 0, %s49
      %s67 = sphi 0, %s67
      %s69 = sphi 0, %s67
      %s70 = sphi 0, %s69
      %s84 = sphi 0, %s70
      %s90 = sphi 0, %s92
      %s93 = sphi 0, %s90
      %s94 = sphi 0, %s93
      %s110 = sphi 0, %s94
    $region4: #{tpu_custom_call.1} parent=1 // loop_header_branch
      %15 = sbr.rel (%p13) target = $region8
    $region5: #{tpu_custom_call.1} parent=1 // loop_body
      %s17 = ssub.s32 %s12, 1
      %s18 = ssub.s32 %s12, 2
      %s19 = sadd.s32 %s12, 1
      %s20 = ssub.s32 %s12, %s19
      %p21 = scmp.eq.s32.totalorder %s20, 0
      %s23 = sadd.s32 %s22, 1
      %s24 = scalar_select %p21, %s22, %s23
      %p27 = pneg %p21
      %p28 = scmp.eq.s32.totalorder %s12, 1
      %p29 = por %p27, %p28
      %p30 = scmp.ne.s32.totalorder %s22, %s25
      %p31 = scmp.eq.s32.totalorder %s12, 0
      %p32 = por %p30, %p31
      %p33 = scmp.ne.s32.totalorder %s22, %s25
      %p34 = scmp.eq.s32.totalorder %s17, 1
      %p35 = por %p33, %p34
      %p36 = scmp.ne.s32.totalorder %s25, %s26
      %p37 = scmp.eq.s32.totalorder %s17, 0
      %p38 = por %p36, %p37
      %p39 = scmp.ne.s32.totalorder %s25, %s26
      %p40 = scmp.eq.s32.totalorder %s18, 1
      %p41 = por %p39, %p40
      %p43 = scmp.ne.s32.totalorder %s26, %s42
      %p44 = scmp.eq.s32.totalorder %s18, 0
      %p45 = por %p43, %p44
      %s47 = sadd.s32 %s46, 1
      %p50 = scmp.eq.s32.totalorder %s12, 1
      %p51 = scmp.ne.s32.totalorder %s46, %s48
      %p52 = scmp.eq.s32.totalorder %s12, 0
      %p53 = por %p51, %p52
      %p54 = scmp.ne.s32.totalorder %s46, %s48
      %p55 = scmp.eq.s32.totalorder %s17, 1
      %p56 = por %p54, %p55
      %p57 = scmp.ne.s32.totalorder %s48, %s49
      %p58 = scmp.eq.s32.totalorder %s17, 0
      %p59 = por %p57, %p58
      %p60 = scmp.ne.s32.totalorder %s48, %s49
      %p61 = scmp.eq.s32.totalorder %s18, 1
      %p62 = por %p60, %p61
      %p64 = scmp.ne.s32.totalorder %s49, %s63
      %p65 = scmp.eq.s32.totalorder %s18, 0
      %p66 = por %p64, %p65
      %s68 = sadd.s32 %s67, 1
      %p71 = scmp.eq.s32.totalorder %s12, 1
      %p72 = scmp.ne.s32.totalorder %s67, %s69
      %p73 = scmp.eq.s32.totalorder %s12, 0
      %p74 = por %p72, %p73
      %p75 = scmp.ne.s32.totalorder %s67, %s69
      %p76 = scmp.eq.s32.totalorder %s17, 1
      %p77 = por %p75, %p76
      %p78 = scmp.ne.s32.totalorder %s69, %s70
      %p79 = scmp.eq.s32.totalorder %s17, 0
      %p80 = por %p78, %p79
      %p81 = scmp.ne.s32.totalorder %s69, %s70
      %p82 = scmp.eq.s32.totalorder %s18, 1
      %p83 = por %p81, %p82
      %p85 = scmp.ne.s32.totalorder %s70, %s84
      %p86 = scmp.eq.s32.totalorder %s18, 0
      %p87 = por %p85, %p86
      %s88 = ssub.s32 %s12, %s19
      %p89 = scmp.eq.s32.totalorder %s88, 0
      %s91 = sadd.s32 %s90, 1
      %s92 = scalar_select %p89, %s90, %s91
      %p95 = pneg %p89
      %p96 = scmp.eq.s32.totalorder %s12, 1
      %p97 = por %p95, %p96
      %p98 = scmp.ne.s32.totalorder %s90, %s93
      %p99 = scmp.eq.s32.totalorder %s12, 0
      %p100 = por %p98, %p99
      %p101 = scmp.ne.s32.totalorder %s90, %s93
      %p102 = scmp.eq.s32.totalorder %s17, 1
      %p103 = por %p101, %p102
      %p104 = scmp.ne.s32.totalorder %s93, %s94
      %p105 = scmp.eq.s32.totalorder %s17, 0
      %p106 = por %p104, %p105
      %p107 = scmp.ne.s32.totalorder %s93, %s94
      %p108 = scmp.eq.s32.totalorder %s18, 1
      %p109 = por %p107, %p108
      %p111 = scmp.ne.s32.totalorder %s94, %s110
      %p112 = scmp.eq.s32.totalorder %s18, 0
      %p113 = por %p111, %p112
      %p114 = scmp.le.s32.totalorder 1, %s12
      %p115 = scmp.lt.s32.totalorder %s12, 3
      %p116 = pnand %p114, %p115
      %p117 = pneg %p116
      // Predicated region
      $region9: #{tpu_custom_call.1} parent=5 // pred_check
        _
      $region10: #{tpu_custom_call.1} parent=5 // pred_check_branch
        %119 = sbr.rel (%p116) target = $region12
      $region11: #{tpu_custom_call.1} parent=5 // pred_region
        %s120 = ssub.s32 %s12, 1
        // Predicated region
        $region13: #{tpu_custom_call.1} parent=11 // pred_check
          %p121 = pneg %p59
        $region14: #{tpu_custom_call.1} parent=11 // pred_check_branch
          %123 = sbr.rel (%p121) target = $region16
        $region15: #{tpu_custom_call.1} parent=11 // pred_region
          _
        $region16: #{tpu_custom_call.1} parent=11 // pred_fallthru
          _
        // Predicated region
        $region17: #{tpu_custom_call.1} parent=11 // pred_check
          %p124 = pneg %p80
        $region18: #{tpu_custom_call.1} parent=11 // pred_check_branch
          %126 = sbr.rel (%p124) target = $region20
        $region19: #{tpu_custom_call.1} parent=11 // pred_region
          _
        $region20: #{tpu_custom_call.1} parent=11 // pred_fallthru
          _
      $region12: #{tpu_custom_call.1} parent=5 // pred_fallthru
        _
      %p127 = scmp.lt.s32.totalorder %s12, 2
      // Predicated region
      $region21: #{tpu_custom_call.1} parent=5 // pred_check
        %p128 = pneg %p127
      $region22: #{tpu_custom_call.1} parent=5 // pred_check_branch
        %130 = sbr.rel (%p128) target = $region24
      $region23: #{tpu_custom_call.1} parent=5 // pred_region
        // Predicated region
        $region25: #{tpu_custom_call.1} parent=23 // pred_check
          %p131 = pneg %p32
        $region26: #{tpu_custom_call.1} parent=23 // pred_check_branch
          %133 = sbr.rel (%p131) target = $region28
        $region27: #{tpu_custom_call.1} parent=23 // pred_region
          %p134 = scmp.lt.s32.totalorder %s12, 1
          %s135 = scalar_select %p134, %s12, 1
          %s136 = smul.addr %s135, 4
          %s137 = scalar_lea.vmem %s0, %s136
        $region28: #{tpu_custom_call.1} parent=23 // pred_fallthru
          _
      $region24: #{tpu_custom_call.1} parent=5 // pred_fallthru
        _
      %p138 = scmp.le.s32.totalorder 1, %s12
      %p139 = scmp.lt.s32.totalorder %s12, 3
      %p140 = pnand %p138, %p139
      %p141 = pneg %p140
      // Predicated region
      $region29: #{tpu_custom_call.1} parent=5 // pred_check
        _
      $region30: #{tpu_custom_call.1} parent=5 // pred_check_branch
        %143 = sbr.rel (%p140) target = $region32
      $region31: #{tpu_custom_call.1} parent=5 // pred_region
        %s144 = ssub.s32 %s12, 1
        %p145 = scmp.lt.s32.totalorder %s17, 1
        %s146 = scalar_select %p145, %s17, 1
        %s147 = smul.addr %s146, 4
        %s148 = scalar_lea.vmem %s0, %s147
        %p149 = pneg %p38
        %p150 = pneg %p35
        %p151 = pneg %p59
        %p152 = pneg %p56
        %p153 = pneg %p80
        %p154 = pneg %p77
        %p155 = pneg %p106
        %p156 = pneg %p103
        %s157 = sand.u32 %s93, 1
        %s158 = scalar_lea.sflag [#allocation4], %s157
        %s159 = sand.u32 %s93, 1
        %s160 = smul.addr %s159, 8
        %s161 = scalar_lea.vmem [#allocation3], %s160
        %p162 = scmp.lt.s32.totalorder %s17, 1
        %s163 = scalar_select %p162, %s17, 1
        %s164 = smul.addr %s163, 4
        %s165 = scalar_lea.vmem %s0, %s164
        %vm166 = vcmask 1043456
        %vm167 = vcmask 261124
        %vm168 = vmor %vm167, %vm166
        %169 = vst.msk [vmem:[#allocation2] sm:$0xff] %vm168, 0.0
        %v170 = vld [vmem:[%s165] sm:$0xf]
        %172 = vrot.lane.b32.xlu0 %v170, 16
        %v173 = vpop.permute.xlu0 %172
        %v174 = vrot.slane %v173, 4
        %vm175 = vcmask 130048
        %v176 = vsel %vm175, %v174, %v173
        %vm178 = vcmask 1043584
        %vm179 = vcmask 130052
        %vm180 = vmor %vm179, %vm178
        %181 = vst.msk [vmem:[#allocation2] sm:$0xff] %vm180, %v176
        %v182 = vld [vmem:[#allocation2] sm:$0xf]
        %v183 = vld [vmem:[%s1] sm:$0xff]
        %v184 = vld [vmem:[#allocation2] sm:$0xff]
        %s185 = scalar_lea.vmem %s1, 8
        %v186 = vld [vmem:[%s185] sm:$0xff]
        %v188 = vcombine.high %v184, %v184
        %189 = vrot.lane.b32.xlu0 %v184, 112
        %v190 = vpop.permute.xlu0 %189
        %191 = vrot.lane.b32.xlu0 %v188, 112
        %v192 = vpop.permute.xlu0 %191
        %vm193 = vcmask 916480
        %v194 = vsel %vm193, %v190, %v192
        %vm195 = vcmask 31744
        %v197 = vsel %vm195, %v186, 0
        %v199 = vsel %vm166, %v194, 0
        %201 = vmatprep.subr.mxu0 0.0
        %202 = vmatpush1.msra.mxu0 %v199
        %203 = vmatprep.subr.mxu0 0.0
        %204 = vmatpush1.msra.mxu0 0.0
        %205 = vmatprep.subr.mxu0 0.0
        %206 = vmatpush1.msra.mxu0 0.0
        %207 = vmatprep.subr.mxu0 0.0
        %208 = vmatpush1.msra.mxu0 0.0
        %209 = vmatprep.subr.mxu0 0.0
        %210 = vmatpush1.msra.mxu0 0.0
        %211 = vmatprep.subr.mxu0 0.0
        %212 = vmatpush1.msra.mxu0 0.0
        %213 = vmatprep.subr.mxu0 0.0
        %214 = vmatpush1.msra.mxu0 0.0
        %215 = vmatprep.subr.mxu0 0.0
        %216 = vmatpush1.msra.mxu0 0.0
        %217 = vmatprep.subr.mxu0 0.0
        %218 = vmatpush1.msra.mxu0 0.0
        %219 = vmatprep.subr.mxu0 0.0
        %220 = vmatpush1.msra.mxu0 0.0
        %221 = vmatprep.subr.mxu0 0.0
        %222 = vmatpush1.msra.mxu0 0.0
        %223 = vmatprep.subr.mxu0 0.0
        %224 = vmatpush1.msra.mxu0 0.0
        %225 = vmatprep.subr.mxu0 0.0
        %226 = vmatpush1.msra.mxu0 0.0
        %227 = vmatprep.subr.mxu0 0.0
        %228 = vmatpush1.msra.mxu0 0.0
        %229 = vmatprep.subr.mxu0 0.0
        %230 = vmatpush1.msra.mxu0 0.0
        %231 = vmatprep.subr.mxu0 0.0
        %232 = vmatpush1.msra.mxu0 0.0
        %233 = vmatprep.subr.mxu0 0.0
        %234 = vmatpush1.msra.mxu0 0.0
        %235 = vmatprep.subr.mxu0 0.0
        %236 = vmatpush1.msra.mxu0 0.0
        %237 = vmatprep.subr.mxu0 0.0
        %238 = vmatpush1.msra.mxu0 0.0
        %239 = vmatprep.subr.mxu0 0.0
        %240 = vmatpush1.msra.mxu0 0.0
        %241 = vmatprep.subr.mxu0 0.0
        %242 = vmatpush1.msra.mxu0 0.0
        %243 = vmatprep.subr.mxu0 0.0
        %244 = vmatpush1.msra.mxu0 0.0
        %245 = vmatprep.subr.mxu0 0.0
        %246 = vmatpush1.msra.mxu0 0.0
        %247 = vmatprep.subr.mxu0 0.0
        %248 = vmatpush1.msra.mxu0 0.0
        %249 = vmatprep.subr.mxu0 0.0
        %250 = vmatpush1.msra.mxu0 0.0
        %251 = vmatprep.subr.mxu0 0.0
        %252 = vmatpush1.msra.mxu0 0.0
        %253 = vmatprep.subr.mxu0 0.0
        %254 = vmatpush1.msra.mxu0 0.0
        %255 = vmatprep.subr.mxu0 0.0
        %256 = vmatpush1.msra.mxu0 0.0
        %257 = vmatprep.subr.mxu0 0.0
        %258 = vmatpush1.msra.mxu0 0.0
        %259 = vmatprep.subr.mxu0 0.0
        %260 = vmatpush1.msra.mxu0 0.0
        %261 = vmatprep.subr.mxu0 0.0
        %262 = vmatpush1.msra.mxu0 0.0
        %263 = vmatprep.subr.mxu0 0.0
        %264 = vmatpush1.msra.mxu0 0.0
        %265 = vmatprep.mubr.f32.mxu0 0.0
        %266 = vmatmul.mubr.f32.gmra.mrb[0].mxu0 %v197
        %v267 = vpop.f32.mrb[0].mxu0
        %v268 = vadd.f32 0.0, %v267
        %v269 = vpop.f32.mrb[0].mxu0
        %270 = vdwg.mxu0
        %v272 = vsel %vm195, %v183, 0
        %v275 = vsel %vm166, %v182, 0
        %277 = vmatprep.subr.mxu0 0.0
        %278 = vmatpush1.msra.mxu0 %v275
        %279 = vmatprep.subr.mxu0 0.0
        %280 = vmatpush1.msra.mxu0 0.0
        %281 = vmatprep.subr.mxu0 0.0
        %282 = vmatpush1.msra.mxu0 0.0
        %283 = vmatprep.subr.mxu0 0.0
        %284 = vmatpush1.msra.mxu0 0.0
        %285 = vmatprep.subr.mxu0 0.0
        %286 = vmatpush1.msra.mxu0 0.0
        %287 = vmatprep.subr.mxu0 0.0
        %288 = vmatpush1.msra.mxu0 0.0
        %289 = vmatprep.subr.mxu0 0.0
        %290 = vmatpush1.msra.mxu0 0.0
        %291 = vmatprep.subr.mxu0 0.0
        %292 = vmatpush1.msra.mxu0 0.0
        %293 = vmatprep.subr.mxu0 0.0
        %294 = vmatpush1.msra.mxu0 0.0
        %295 = vmatprep.subr.mxu0 0.0
        %296 = vmatpush1.msra.mxu0 0.0
        %297 = vmatprep.subr.mxu0 0.0
        %298 = vmatpush1.msra.mxu0 0.0
        %299 = vmatprep.subr.mxu0 0.0
        %300 = vmatpush1.msra.mxu0 0.0
        %301 = vmatprep.subr.mxu0 0.0
        %302 = vmatpush1.msra.mxu0 0.0
        %303 = vmatprep.subr.mxu0 0.0
        %304 = vmatpush1.msra.mxu0 0.0
        %305 = vmatprep.subr.mxu0 0.0
        %306 = vmatpush1.msra.mxu0 0.0
        %307 = vmatprep.subr.mxu0 0.0
        %308 = vmatpush1.msra.mxu0 0.0
        %309 = vmatprep.subr.mxu0 0.0
        %310 = vmatpush1.msra.mxu0 0.0
        %311 = vmatprep.subr.mxu0 0.0
        %312 = vmatpush1.msra.mxu0 0.0
        %313 = vmatprep.subr.mxu0 0.0
        %314 = vmatpush1.msra.mxu0 0.0
        %315 = vmatprep.subr.mxu0 0.0
        %316 = vmatpush1.msra.mxu0 0.0
        %317 = vmatprep.subr.mxu0 0.0
        %318 = vmatpush1.msra.mxu0 0.0
        %319 = vmatprep.subr.mxu0 0.0
        %320 = vmatpush1.msra.mxu0 0.0
        %321 = vmatprep.subr.mxu0 0.0
        %322 = vmatpush1.msra.mxu0 0.0
        %323 = vmatprep.subr.mxu0 0.0
        %324 = vmatpush1.msra.mxu0 0.0
        %325 = vmatprep.subr.mxu0 0.0
        %326 = vmatpush1.msra.mxu0 0.0
        %327 = vmatprep.subr.mxu0 0.0
        %328 = vmatpush1.msra.mxu0 0.0
        %329 = vmatprep.subr.mxu0 0.0
        %330 = vmatpush1.msra.mxu0 0.0
        %331 = vmatprep.subr.mxu0 0.0
        %332 = vmatpush1.msra.mxu0 0.0
        %333 = vmatprep.subr.mxu0 0.0
        %334 = vmatpush1.msra.mxu0 0.0
        %335 = vmatprep.subr.mxu0 0.0
        %336 = vmatpush1.msra.mxu0 0.0
        %337 = vmatprep.subr.mxu0 0.0
        %338 = vmatpush1.msra.mxu0 0.0
        %339 = vmatprep.subr.mxu0 0.0
        %340 = vmatpush1.msra.mxu0 0.0
        %341 = vmatprep.mubr.f32.mxu0 0.0
        %342 = vmatmul.mubr.f32.gmra.mrb[0].mxu0 %v272
        %v343 = vpop.f32.mrb[0].mxu0
        %v344 = vadd.f32 %v268, %v343
        %v345 = vpop.f32.mrb[0].mxu0
        %346 = vdwg.mxu0
        %v347 = vld [vmem:[#allocation2] sm:$0xff]
        %s348 = scalar_lea.vmem %s1, 16
        %v349 = vld [vmem:[%s348] sm:$0xff]
        %v351 = vcombine.high %v347, %v347
        %352 = vrot.lane.b32.xlu0 %v347, 96
        %v353 = vpop.permute.xlu0 %352
        %354 = vrot.lane.b32.xlu0 %v351, 96
        %v355 = vpop.permute.xlu0 %354
        %vm356 = vcmask 785408
        %v357 = vsel %vm356, %v353, %v355
        %v359 = vsel %vm195, %v349, 0
        %v361 = vsel %vm166, %v357, 0
        %363 = vmatprep.subr.mxu0 0.0
        %364 = vmatpush1.msra.mxu0 %v361
        %365 = vmatprep.subr.mxu0 0.0
        %366 = vmatpush1.msra.mxu0 0.0
        %367 = vmatprep.subr.mxu0 0.0
        %368 = vmatpush1.msra.mxu0 0.0
        %369 = vmatprep.subr.mxu0 0.0
        %370 = vmatpush1.msra.mxu0 0.0
        %371 = vmatprep.subr.mxu0 0.0
        %372 = vmatpush1.msra.mxu0 0.0
        %373 = vmatprep.subr.mxu0 0.0
        %374 = vmatpush1.msra.mxu0 0.0
        %375 = vmatprep.subr.mxu0 0.0
        %376 = vmatpush1.msra.mxu0 0.0
        %377 = vmatprep.subr.mxu0 0.0
        %378 = vmatpush1.msra.mxu0 0.0
        %379 = vmatprep.subr.mxu0 0.0
        %380 = vmatpush1.msra.mxu0 0.0
        %381 = vmatprep.subr.mxu0 0.0
        %382 = vmatpush1.msra.mxu0 0.0
        %383 = vmatprep.subr.mxu0 0.0
        %384 = vmatpush1.msra.mxu0 0.0
        %385 = vmatprep.subr.mxu0 0.0
        %386 = vmatpush1.msra.mxu0 0.0
        %387 = vmatprep.subr.mxu0 0.0
        %388 = vmatpush1.msra.mxu0 0.0
        %389 = vmatprep.subr.mxu0 0.0
        %390 = vmatpush1.msra.mxu0 0.0
        %391 = vmatprep.subr.mxu0 0.0
        %392 = vmatpush1.msra.mxu0 0.0
        %393 = vmatprep.subr.mxu0 0.0
        %394 = vmatpush1.msra.mxu0 0.0
        %395 = vmatprep.subr.mxu0 0.0
        %396 = vmatpush1.msra.mxu0 0.0
        %397 = vmatprep.subr.mxu0 0.0
        %398 = vmatpush1.msra.mxu0 0.0
        %399 = vmatprep.subr.mxu0 0.0
        %400 = vmatpush1.msra.mxu0 0.0
        %401 = vmatprep.subr.mxu0 0.0
        %402 = vmatpush1.msra.mxu0 0.0
        %403 = vmatprep.subr.mxu0 0.0
        %404 = vmatpush1.msra.mxu0 0.0
        %405 = vmatprep.subr.mxu0 0.0
        %406 = vmatpush1.msra.mxu0 0.0
        %407 = vmatprep.subr.mxu0 0.0
        %408 = vmatpush1.msra.mxu0 0.0
        %409 = vmatprep.subr.mxu0 0.0
        %410 = vmatpush1.msra.mxu0 0.0
        %411 = vmatprep.subr.mxu0 0.0
        %412 = vmatpush1.msra.mxu0 0.0
        %413 = vmatprep.subr.mxu0 0.0
        %414 = vmatpush1.msra.mxu0 0.0
        %415 = vmatprep.subr.mxu0 0.0
        %416 = vmatpush1.msra.mxu0 0.0
        %417 = vmatprep.subr.mxu0 0.0
        %418 = vmatpush1.msra.mxu0 0.0
        %419 = vmatprep.subr.mxu0 0.0
        %420 = vmatpush1.msra.mxu0 0.0
        %421 = vmatprep.subr.mxu0 0.0
        %422 = vmatpush1.msra.mxu0 0.0
        %423 = vmatprep.subr.mxu0 0.0
        %424 = vmatpush1.msra.mxu0 0.0
        %425 = vmatprep.subr.mxu0 0.0
        %426 = vmatpush1.msra.mxu0 0.0
        %427 = vmatprep.mubr.f32.mxu0 0.0
        %428 = vmatmul.mubr.f32.gmra.mrb[0].mxu0 %v359
        %v429 = vpop.f32.mrb[0].mxu0
        %v430 = vadd.f32 0.0, %v429
        %v431 = vpop.f32.mrb[0].mxu0
        %432 = vdwg.mxu0
        %v433 = vadd.f32 %v344, %v430
        %v434 = vld [vmem:[%s2] sm:$0xff]
        %436 = vset.pattern.permute.xlu0 0
        %437 = vperm.xlu0 %436, %v434
        %v438 = vpop.permute.xlu0 %437
        %v440 = vadd.f32 %v433, %v438
        %v441 = vld [vmem:[%s165] sm:$0xf]
        %v442 = vsel %vm166, %v441, 0.0
        %v443 = vadd.f32 %v440, %v442
        %v444 = vmax.f32 %v443, 0.0
        %445 = vst [vmem:[%s161] sm:$0xff] %v444
        %s446 = sand.u32 %s93, 1
        %s447 = scalar_lea.sflag [#allocation4], %s446
        %s448 = sand.u32 %s93, 1
        %s449 = smul.addr %s448, 8
        %s450 = scalar_lea.vmem [#allocation3], %s449
        // Predicated region
        $region33: #{tpu_custom_call.1} parent=31 // pred_check
          %p451 = pneg %p103
        $region34: #{tpu_custom_call.1} parent=31 // pred_check_branch
          %453 = sbr.rel (%p451) target = $region36
        $region35: #{tpu_custom_call.1} parent=31 // pred_region
          %s455 = ssub.s32 128, 128
          %456 = vsyncadd %s447, %s455
          %s457 = smul.addr %s17, 128
          %s458 = scalar_lea.hbm %s3, %s457
          %s460 = sshll.u32 %s450, 4
          %s461 = int_to_ptr.vmem [resolvable:$true] %s460
          %463 = dma.vmem_to_hbm [thread:$0]  %s461, 128, %s458, %s447
        $region36: #{tpu_custom_call.1} parent=31 // pred_fallthru
          _
      $region32: #{tpu_custom_call.1} parent=5 // pred_fallthru
        _
      %p464 = scmp.le.s32.totalorder 2, %s12
      // Predicated region
      $region37: #{tpu_custom_call.1} parent=5 // pred_check
        %p465 = pneg %p464
      $region38: #{tpu_custom_call.1} parent=5 // pred_check_branch
        %467 = sbr.rel (%p465) target = $region40
      $region39: #{tpu_custom_call.1} parent=5 // pred_region
        %s468 = ssub.s32 %s12, 2
        // Predicated region
        $region41: #{tpu_custom_call.1} parent=39 // pred_check
          %p469 = pneg %p109
        $region42: #{tpu_custom_call.1} parent=39 // pred_check_branch
          %471 = sbr.rel (%p469) target = $region44
        $region43: #{tpu_custom_call.1} parent=39 // pred_region
          %s472 = sand.u32 %s94, 1
          %s473 = scalar_lea.sflag [#allocation4], %s472
          %s474 = sand.u32 %s94, 1
          %s475 = smul.addr %s474, 8
          %s476 = scalar_lea.vmem [#allocation3], %s475
          %477 = dma.done %s473, 128
        $region44: #{tpu_custom_call.1} parent=39 // pred_fallthru
          _
      $region40: #{tpu_custom_call.1} parent=5 // pred_fallthru
        _
    $region6: #{tpu_custom_call.1} parent=1 // loop_footer
      %s16 = sadd.s32 1, %s12
    $region7: #{tpu_custom_call.1} parent=1 // loop_footer_branch
      %11 = sbr.rel target = $region3
    $region8: #{tpu_custom_call.1} parent=1 // loop_exit
      _
    %478 = vsyncpa [#allocation4], 1
    %s479 = scalar_lea.sflag [#allocation4], 1
    %480 = vsyncpa %s479, 1

</llo_original>
